<compile_context>
chip_gen: v5e
topology: v5e:2x2
jax: 0.10.0
libtpu: 0.0.40
codegen_flags: <defaults>
</compile_context>

<pallas_src>
import jax
import jax.numpy as jnp
from jax import lax
from jax.experimental import pallas as pl
from jax.experimental.pallas import tpu as pltpu


def _round_up(x, m):
    return ((x + m - 1) // m) * m


# ---------------------------------------------------------------------------
# Fused multi-layer GRU kernel.
#   grid = (n_layers,), "arbitrary" (sequential; output block is resident and
#   carries the sequence between layers).
# ---------------------------------------------------------------------------
def _gru_stack_kernel(x_ref, wih_ref, whh_ref, bih_ref, bhh_ref, out_ref,
                      gi_r_ref, gi_z_ref, gi_n_ref):
    layer = pl.program_id(0)
    T, Bp, Hp = out_ref.shape
    cdt = wih_ref.dtype  # matmul dtype (f32 or bf16); accumulation is f32.

    # Layer 0 consumes the (padded, time-major) input; later layers consume the
    # previous layer's output, which is still resident in the out_ref VMEM
    # block (constant output block index across the layer axis).
    @pl.when(layer == 0)
    def _():
        out_ref[...] = x_ref[...].astype(jnp.float32)

    # ---- Hoisted input projection: one big GEMM per gate (gate-major) ------
    seq_flat = out_ref[...].reshape(T * Bp, Hp).astype(cdt)
    gi_r_ref[...] = (jnp.dot(seq_flat, wih_ref[0],
                             preferred_element_type=jnp.float32)
                     + bih_ref[0]).reshape(T, Bp, Hp)
    gi_z_ref[...] = (jnp.dot(seq_flat, wih_ref[1],
                             preferred_element_type=jnp.float32)
                     + bih_ref[1]).reshape(T, Bp, Hp)
    gi_n_ref[...] = (jnp.dot(seq_flat, wih_ref[2],
                             preferred_element_type=jnp.float32)
                     + bih_ref[2]).reshape(T, Bp, Hp)

    # ---- Sequential recurrence, fully in-kernel (no per-step grid cost) ----
    def step(t, h):
        hc = h.astype(cdt)
        gh_r = jnp.dot(hc, whh_ref[0], preferred_element_type=jnp.float32) + bhh_ref[0]
        gh_z = jnp.dot(hc, whh_ref[1], preferred_element_type=jnp.float32) + bhh_ref[1]
        gh_n = jnp.dot(hc, whh_ref[2], preferred_element_type=jnp.float32) + bhh_ref[2]
        # PyTorch gate order [r, z, n];  n = tanh(i_n + r * (W_hn h + b_hn)).
        r = jax.nn.sigmoid(gi_r_ref[t] + gh_r)
        z = jax.nn.sigmoid(gi_z_ref[t] + gh_z)
        n = jnp.tanh(gi_n_ref[t] + r * gh_n)
        h_new = (1.0 - z) * n + z * h
        out_ref[t] = h_new           # becomes next layer's input (stays in VMEM)
        return h_new

    lax.fori_loop(0, T, step, jnp.zeros((Bp, Hp), jnp.float32))


def gru_stack(x_pad, wih, whh, bih, bhh):
    """x_pad: (T, Bp, Hp); wih/whh: (L, 3, Hp, Hp); bih/bhh: (L, 3, 1, Hp)."""
    T, Bp, Hp = x_pad.shape
    L = wih.shape[0]
    return pl.pallas_call(
        _gru_stack_kernel,
        out_shape=jax.ShapeDtypeStruct((T, Bp, Hp), jnp.float32),
        grid_spec=pltpu.PrefetchScalarGridSpec(
            num_scalar_prefetch=0,
            grid=(L,),
            in_specs=[
                # Input sequence: constant block (only read at layer 0).
                pl.BlockSpec((T, Bp, Hp), lambda l: (0, 0, 0)),
                # Per-layer, gate-major, pre-transposed weights.
                pl.BlockSpec((None, 3, Hp, Hp), lambda l: (l, 0, 0, 0)),
                pl.BlockSpec((None, 3, Hp, Hp), lambda l: (l, 0, 0, 0)),
                pl.BlockSpec((None, 3, 1, Hp), lambda l: (l, 0, 0, 0)),
                pl.BlockSpec((None, 3, 1, Hp), lambda l: (l, 0, 0, 0)),
            ],
            # Constant output block index => resident across layers (carries
            # the inter-layer sequence in VMEM; written back to HBM once).
            out_specs=pl.BlockSpec((T, Bp, Hp), lambda l: (0, 0, 0)),
            scratch_shapes=[pltpu.VMEM((T, Bp, Hp), jnp.float32)] * 3,
        ),
        # Layer axis MUST stay "arbitrary": the resident out block carries
        # state between grid iterations.
        compiler_params=pltpu.CompilerParams(
            dimension_semantics=("arbitrary",)),
    )(x_pad, wih, whh, bih, bhh)


# ---------------------------------------------------------------------------
# Linear head: row-tiled out = x @ W^T + b with a "parallel" row axis.
# Weight is pre-transposed in the wrapper (no in-kernel .T).
# ---------------------------------------------------------------------------
def _linear_kernel(x_ref, w_ref, b_ref, o_ref):
    o_ref[...] = (jnp.dot(x_ref[...], w_ref[...],
                          preferred_element_type=jnp.float32)
                  + b_ref[...]).astype(o_ref.dtype)


def _pick_row_tile(rows, target=256):
    if rows <= target:
        return rows
    for tm in range(target, 7, -8):          # rows is a multiple of 8
        if rows % tm == 0:
            return tm
    return rows


def linear_pallas(x_2d, w_t, b_row):
    """x_2d: (N, Hp), w_t: (Hp, Op), b_row: (1, Op) -> (N, Op) f32."""
    rows, Hp = x_2d.shape
    Op = w_t.shape[1]
    tm = _pick_row_tile(rows)
    return pl.pallas_call(
        _linear_kernel,
        out_shape=jax.ShapeDtypeStruct((rows, Op), jnp.float32),
        grid_spec=pltpu.PrefetchScalarGridSpec(
            num_scalar_prefetch=0,
            grid=(rows // tm,),
            in_specs=[
                pl.BlockSpec((tm, Hp), lambda i: (i, 0)),
                pl.BlockSpec((Hp, Op), lambda i: (0, 0)),
                pl.BlockSpec((1, Op), lambda i: (0, 0)),
            ],
            out_specs=pl.BlockSpec((tm, Op), lambda i: (i, 0)),
        ),
        compiler_params=pltpu.CompilerParams(
            dimension_semantics=("parallel",)),
    )(x_2d, w_t, b_row)


# ---------------------------------------------------------------------------
# Parameter packing: gate-major, transposed, zero-padded.
# ---------------------------------------------------------------------------
def _pack_gate_major_t(w, H, Hp, dtype):
    """(3H, H_in) PyTorch weight -> (3, Hp, Hp) where [g] = W_g^T, zero-padded."""
    H_in = w.shape[1]
    out = jnp.zeros((3, Hp, Hp), dtype)
    for g in range(3):
        out = out.at[g, :H_in, :H].set(w[g * H:(g + 1) * H, :].T.astype(dtype))
    return out


def _pack_bias(b, H, Hp):
    out = jnp.zeros((3, 1, Hp), jnp.float32)
    for g in range(3):
        out = out.at[g, 0, :H].set(b[g * H:(g + 1) * H].astype(jnp.float32))
    return out


# ---------------------------------------------------------------------------
# RNNDecoder forward
# ---------------------------------------------------------------------------
def rnn_decoder_forward(x_bht, params, matmul_dtype=jnp.float32):
    """x_bht: (B, hid, T) (PyTorch module input convention) -> (B, T, out_dim)."""
    # x.permute(0, 2, 1) -> (B, T, H); then time-major (T, B, H) for the kernel.
    x_tbh = jnp.transpose(x_bht, (2, 0, 1))
    T, B, H_in = x_tbh.shape

    layers = params["gru_layers"]
    H = layers[0]["w_hh"].shape[1]
    assert H_in == H, "nn.GRU(gru_hid_dim, gru_hid_dim, ...) expects in_dim == hid_dim"

    # Pad batch to sublane multiple (8) and hidden to lane multiple (128).
    Bp = _round_up(B, 8)
    Hp = _round_up(H, 128)

    x_pad = jnp.zeros((T, Bp, Hp), matmul_dtype).at[:, :B, :H].set(
        x_tbh.astype(matmul_dtype))

    wih = jnp.stack([_pack_gate_major_t(l["w_ih"], H, Hp, matmul_dtype) for l in layers])
    whh = jnp.stack([_pack_gate_major_t(l["w_hh"], H, Hp, matmul_dtype) for l in layers])
    bih = jnp.stack([_pack_bias(l["b_ih"], H, Hp) for l in layers])
    bhh = jnp.stack([_pack_bias(l["b_hh"], H, Hp) for l in layers])

    gru_out = gru_stack(x_pad, wih, whh, bih, bhh)          # (T, Bp, Hp) f32

    # Linear head (pre-transposed, padded weights; lane-dense padded output).
    out_dim = params["fc_w"].shape[0]
    Op = _round_up(out_dim, 128)
    fc_w_t = jnp.zeros((Hp, Op), matmul_dtype).at[:H, :out_dim].set(
        params["fc_w"].T.astype(matmul_dtype))
    fc_b = jnp.zeros((1, Op), jnp.float32).at[0, :out_dim].set(
        params["fc_b"].astype(jnp.float32))

    rows = T * Bp
    out_flat = linear_pallas(
        gru_out.reshape(rows, Hp).astype(matmul_dtype), fc_w_t, fc_b)

    out_tbo = out_flat.reshape(T, Bp, Op)[:, :B, :out_dim]
    return jnp.transpose(out_tbo, (1, 0, 2))                # (B, T, out_dim)


def init_params(key, gru_hid_dim, n_layers, out_dim):
    """Deterministic init mimicking PyTorch's uniform(-1/sqrt(H), 1/sqrt(H))."""
    bound = 1.0 / jnp.sqrt(jnp.float32(gru_hid_dim))
    layers = []
    for _ in range(n_layers):
        key, k1, k2, k3, k4 = jax.random.split(key, 5)
        layers.append({
            "w_ih": jax.random.uniform(k1, (3 * gru_hid_dim, gru_hid_dim),
                                       jnp.float32, -bound, bound),
            "w_hh": jax.random.uniform(k2, (3 * gru_hid_dim, gru_hid_dim),
                                       jnp.float32, -bound, bound),
            "b_ih": jax.random.uniform(k3, (3 * gru_hid_dim,),
                                       jnp.float32, -bound, bound),
            "b_hh": jax.random.uniform(k4, (3 * gru_hid_dim,),
                                       jnp.float32, -bound, bound),
        })
    key, k5, k6 = jax.random.split(key, 3)
    fc_w = jax.random.uniform(k5, (out_dim, gru_hid_dim), jnp.float32, -bound, bound)
    fc_b = jax.random.uniform(k6, (out_dim,), jnp.float32, -bound, bound)
    return {"gru_layers": layers, "fc_w": fc_w, "fc_b": fc_b}


# Pure-JAX reference (same math) for the correctness check.
def _reference_forward(x_bht, params):
    x = jnp.transpose(x_bht, (0, 2, 1))          # (B, T, H)
    B, T, H = x.shape
    h_seq = x
    for layer in params["gru_layers"]:
        w_ih, w_hh = layer["w_ih"], layer["w_hh"]
        b_ih, b_hh = layer["b_ih"], layer["b_hh"]
        h = jnp.zeros((B, H), jnp.float32)
        outs = []
        for t in range(T):
            xt = h_seq[:, t, :]
            gi = xt @ w_ih.T + b_ih
            gh = h @ w_hh.T + b_hh
            i_r, i_z, i_n = gi[:, :H], gi[:, H:2 * H], gi[:, 2 * H:]
            h_r, h_z, h_n = gh[:, :H], gh[:, H:2 * H], gh[:, 2 * H:]
            r = jax.nn.sigmoid(i_r + h_r)
            z = jax.nn.sigmoid(i_z + h_z)
            n = jnp.tanh(i_n + r * h_n)
            h = (1.0 - z) * n + z * h
            outs.append(h)
        h_seq = jnp.stack(outs, axis=1)
    return h_seq @ params["fc_w"].T + params["fc_b"]


if __name__ == "__main__":
    B, gru_hid_dim, T = 2, 32, 8
    n_layers, out_dim = 2, 4

    key = jax.random.PRNGKey(0)
    key, pkey, xkey = jax.random.split(key, 3)

    params = init_params(pkey, gru_hid_dim, n_layers, out_dim)
    x = jax.random.normal(xkey, (B, gru_hid_dim, T), jnp.float32)

    # f32 path: strict parity with the pure-JAX / PyTorch reference math.
    out = jax.block_until_ready(rnn_decoder_forward(x, params))
    assert out.shape == (B, T, out_dim), out.shape

    ref = jax.block_until_ready(_reference_forward(x, params))
    assert jnp.allclose(out, ref, atol=1e-4, rtol=1e-4), \
        float(jnp.abs(out - ref).max())

    # bf16-matmul fast path (f32 accumulation, f32 gate math): exercise it.
    out_bf16 = jax.block_until_ready(
        rnn_decoder_forward(x, params, matmul_dtype=jnp.bfloat16))
    assert out_bf16.shape == (B, T, out_dim)
    assert bool(jnp.all(jnp.isfinite(out_bf16)))

    print("KERNEL_OK")
</pallas_src>

<mosaic_0001>
module attributes {stable_mosaic.version = 11 : i64} {
  func.func @_gru_stack_kernel(%arg0: i32, %arg1: memref<8x8x128xf32, #tpu.memory_space<vmem>>, %arg2: memref<1x3x128x128xf32, #tpu.memory_space<vmem>>, %arg3: memref<1x3x128x128xf32, #tpu.memory_space<vmem>>, %arg4: memref<1x3x1x128xf32, #tpu.memory_space<vmem>>, %arg5: memref<1x3x1x128xf32, #tpu.memory_space<vmem>>, %arg6: memref<8x8x128xf32, #tpu.memory_space<vmem>>, %arg7: memref<8x8x128xf32, #tpu.memory_space<vmem>>, %arg8: memref<8x8x128xf32, #tpu.memory_space<vmem>>, %arg9: memref<8x8x128xf32, #tpu.memory_space<vmem>>) attributes {dimension_semantics = [#tpu.dimension_semantics<arbitrary>], iteration_bounds = array<i64: 2>, scalar_prefetch = 0 : i64, scratch_operands = 3 : i64, tpu.core_type = #tpu.core_type<tc>, window_params = [{pipeline_mode = #tpu.pipeline_mode<synchronous>, transform_indices = @transform_0, window_bounds = array<i64: 8, 8, 128>}, {transform_indices = @transform_1, window_bounds = array<i64: 1, 3, 128, 128>}, {transform_indices = @transform_2, window_bounds = array<i64: 1, 3, 128, 128>}, {transform_indices = @transform_3, window_bounds = array<i64: 1, 3, 1, 128>}, {transform_indices = @transform_4, window_bounds = array<i64: 1, 3, 1, 128>}, {pipeline_mode = #tpu.pipeline_mode<synchronous>, transform_indices = @transform_5, window_bounds = array<i64: 8, 8, 128>}]} {
    %c0_i32 = arith.constant 0 : i32
    %0 = arith.cmpi eq, %arg0, %c0_i32 : i32
    %1 = arith.extui %0 : i1 to i32
    %c0_i32_0 = arith.constant 0 : i32
    %2 = arith.cmpi ne, %1, %c0_i32_0 : i32
    scf.if %2 {
      %c0_39 = arith.constant 0 : index
      %c0_40 = arith.constant 0 : index
      %c0_41 = arith.constant 0 : index
      %35 = vector.load %arg1[%c0_39, %c0_40, %c0_41] : memref<8x8x128xf32, #tpu.memory_space<vmem>>, vector<8x8x128xf32>
      %c0_42 = arith.constant 0 : index
      %c0_43 = arith.constant 0 : index
      %c0_44 = arith.constant 0 : index
      %36 = vector.load %arg6[%c0_42, %c0_43, %c0_44] : memref<8x8x128xf32, #tpu.memory_space<vmem>>, vector<8x8x128xf32>
      tpu.vector_store %arg6[%c0_42, %c0_43, %c0_44], %35 {strides = array<i32>} : memref<8x8x128xf32, #tpu.memory_space<vmem>>, vector<8x8x128xf32>,
    } else {
    }
    %c0 = arith.constant 0 : index
    %c0_1 = arith.constant 0 : index
    %c0_2 = arith.constant 0 : index
    %3 = vector.load %arg6[%c0, %c0_1, %c0_2] : memref<8x8x128xf32, #tpu.memory_space<vmem>>, vector<8x8x128xf32>
    %4 = vector.shape_cast %3 : vector<8x8x128xf32> to vector<64x128xf32>
    %c0_3 = arith.constant 0 : index
    %c0_4 = arith.constant 0 : index
    %c0_5 = arith.constant 0 : index
    %c0_6 = arith.constant 0 : index
    %5 = vector.load %arg2[%c0_3, %c0_4, %c0_5, %c0_6] : memref<1x3x128x128xf32, #tpu.memory_space<vmem>>, vector<1x1x128x128xf32>
    %6 = vector.shape_cast %5 : vector<1x1x128x128xf32> to vector<128x128xf32>
    %cst = arith.constant dense<0.000000e+00> : vector<64x128xf32>
    %7 = tpu.matmul %4, %6, %cst {dimension_numbers = #tpu.dot_dimension_numbers<[1], [0], [0], [1], [0, 0, 1, 1], [], []>} : vector<64x128xf32>, vector<128x128xf32>, vector<64x128xf32> -> vector<64x128xf32>
    %c0_7 = arith.constant 0 : index
    %c0_8 = arith.constant 0 : index
    %c0_9 = arith.constant 0 : index
    %c0_10 = arith.constant 0 : index
    %8 = vector.load %arg4[%c0_7, %c0_8, %c0_9, %c0_10] : memref<1x3x1x128xf32, #tpu.memory_space<vmem>>, vector<1x1x1x128xf32>
    %9 = vector.shape_cast %8 : vector<1x1x1x128xf32> to vector<1x128xf32>
    %10 = vector.broadcast %9 : vector<1x128xf32> to vector<64x128xf32>
    %11 = arith.addf %7, %10 : vector<64x128xf32>
    %12 = vector.shape_cast %11 : vector<64x128xf32> to vector<8x8x128xf32>
    %c0_11 = arith.constant 0 : index
    %c0_12 = arith.constant 0 : index
    %c0_13 = arith.constant 0 : index
    %13 = vector.load %arg7[%c0_11, %c0_12, %c0_13] : memref<8x8x128xf32, #tpu.memory_space<vmem>>, vector<8x8x128xf32>
    tpu.vector_store %arg7[%c0_11, %c0_12, %c0_13], %12 {strides = array<i32>} : memref<8x8x128xf32, #tpu.memory_space<vmem>>, vector<8x8x128xf32>,
    %c0_14 = arith.constant 0 : index
    %c1 = arith.constant 1 : index
    %c0_15 = arith.constant 0 : index
    %c0_16 = arith.constant 0 : index
    %14 = vector.load %arg2[%c0_14, %c1, %c0_15, %c0_16] : memref<1x3x128x128xf32, #tpu.memory_space<vmem>>, vector<1x1x128x128xf32>
    %15 = vector.shape_cast %14 : vector<1x1x128x128xf32> to vector<128x128xf32>
    %cst_17 = arith.constant dense<0.000000e+00> : vector<64x128xf32>
    %16 = tpu.matmul %4, %15, %cst_17 {dimension_numbers = #tpu.dot_dimension_numbers<[1], [0], [0], [1], [0, 0, 1, 1], [], []>} : vector<64x128xf32>, vector<128x128xf32>, vector<64x128xf32> -> vector<64x128xf32>
    %c0_18 = arith.constant 0 : index
    %c1_19 = arith.constant 1 : index
    %c0_20 = arith.constant 0 : index
    %c0_21 = arith.constant 0 : index
    %17 = vector.load %arg4[%c0_18, %c1_19, %c0_20, %c0_21] : memref<1x3x1x128xf32, #tpu.memory_space<vmem>>, vector<1x1x1x128xf32>
    %18 = vector.shape_cast %17 : vector<1x1x1x128xf32> to vector<1x128xf32>
    %19 = vector.broadcast %18 : vector<1x128xf32> to vector<64x128xf32>
    %20 = arith.addf %16, %19 : vector<64x128xf32>
    %21 = vector.shape_cast %20 : vector<64x128xf32> to vector<8x8x128xf32>
    %c0_22 = arith.constant 0 : index
    %c0_23 = arith.constant 0 : index
    %c0_24 = arith.constant 0 : index
    %22 = vector.load %arg8[%c0_22, %c0_23, %c0_24] : memref<8x8x128xf32, #tpu.memory_space<vmem>>, vector<8x8x128xf32>
    tpu.vector_store %arg8[%c0_22, %c0_23, %c0_24], %21 {strides = array<i32>} : memref<8x8x128xf32, #tpu.memory_space<vmem>>, vector<8x8x128xf32>,
    %c0_25 = arith.constant 0 : index
    %c2 = arith.constant 2 : index
    %c0_26 = arith.constant 0 : index
    %c0_27 = arith.constant 0 : index
    %23 = vector.load %arg2[%c0_25, %c2, %c0_26, %c0_27] : memref<1x3x128x128xf32, #tpu.memory_space<vmem>>, vector<1x1x128x128xf32>
    %24 = vector.shape_cast %23 : vector<1x1x128x128xf32> to vector<128x128xf32>
    %cst_28 = arith.constant dense<0.000000e+00> : vector<64x128xf32>
    %25 = tpu.matmul %4, %24, %cst_28 {dimension_numbers = #tpu.dot_dimension_numbers<[1], [0], [0], [1], [0, 0, 1, 1], [], []>} : vector<64x128xf32>, vector<128x128xf32>, vector<64x128xf32> -> vector<64x128xf32>
    %c0_29 = arith.constant 0 : index
    %c2_30 = arith.constant 2 : index
    %c0_31 = arith.constant 0 : index
    %c0_32 = arith.constant 0 : index
    %26 = vector.load %arg4[%c0_29, %c2_30, %c0_31, %c0_32] : memref<1x3x1x128xf32, #tpu.memory_space<vmem>>, vector<1x1x1x128xf32>
    %27 = vector.shape_cast %26 : vector<1x1x1x128xf32> to vector<1x128xf32>
    %28 = vector.broadcast %27 : vector<1x128xf32> to vector<64x128xf32>
    %29 = arith.addf %25, %28 : vector<64x128xf32>
    %30 = vector.shape_cast %29 : vector<64x128xf32> to vector<8x8x128xf32>
    %c0_33 = arith.constant 0 : index
    %c0_34 = arith.constant 0 : index
    %c0_35 = arith.constant 0 : index
    %31 = vector.load %arg9[%c0_33, %c0_34, %c0_35] : memref<8x8x128xf32, #tpu.memory_space<vmem>>, vector<8x8x128xf32>
    tpu.vector_store %arg9[%c0_33, %c0_34, %c0_35], %30 {strides = array<i32>} : memref<8x8x128xf32, #tpu.memory_space<vmem>>, vector<8x8x128xf32>,
    %cst_36 = arith.constant 0.000000e+00 : f32
    %32 = vector.broadcast %cst_36 : f32 to vector<8x128xf32>
    %c0_i32_37 = arith.constant 0 : i32
    %c8_i32 = arith.constant 8 : i32
    %33 = arith.addi %c0_i32_37, %c8_i32 : i32
    %c1_i32 = arith.constant 1 : i32
    %34 = scf.for %arg10 = %c0_i32_37 to %33 step %c1_i32 iter_args(%arg11 = %32) -> (vector<8x128xf32>)  : i32 {
      %c0_39 = arith.constant 0 : index
      %c0_40 = arith.constant 0 : index
      %c0_41 = arith.constant 0 : index
      %c0_42 = arith.constant 0 : index
      %35 = vector.load %arg3[%c0_39, %c0_40, %c0_41, %c0_42] : memref<1x3x128x128xf32, #tpu.memory_space<vmem>>, vector<1x1x128x128xf32>
      %36 = vector.shape_cast %35 : vector<1x1x128x128xf32> to vector<128x128xf32>
      %cst_43 = arith.constant dense<0.000000e+00> : vector<8x128xf32>
      %37 = tpu.matmul %arg11, %36, %cst_43 {dimension_numbers = #tpu.dot_dimension_numbers<[1], [0], [0], [1], [0, 0, 1, 1], [], []>} : vector<8x128xf32>, vector<128x128xf32>, vector<8x128xf32> -> vector<8x128xf32>
      %c0_44 = arith.constant 0 : index
      %c0_45 = arith.constant 0 : index
      %c0_46 = arith.constant 0 : index
      %c0_47 = arith.constant 0 : index
      %38 = vector.load %arg5[%c0_44, %c0_45, %c0_46, %c0_47] : memref<1x3x1x128xf32, #tpu.memory_space<vmem>>, vector<1x1x1x128xf32>
      %39 = vector.shape_cast %38 : vector<1x1x1x128xf32> to vector<1x128xf32>
      %40 = vector.broadcast %39 : vector<1x128xf32> to vector<8x128xf32>
      %41 = arith.addf %37, %40 : vector<8x128xf32>
      %c0_48 = arith.constant 0 : index
      %c1_49 = arith.constant 1 : index
      %c0_50 = arith.constant 0 : index
      %c0_51 = arith.constant 0 : index
      %42 = vector.load %arg3[%c0_48, %c1_49, %c0_50, %c0_51] : memref<1x3x128x128xf32, #tpu.memory_space<vmem>>, vector<1x1x128x128xf32>
      %43 = vector.shape_cast %42 : vector<1x1x128x128xf32> to vector<128x128xf32>
      %cst_52 = arith.constant dense<0.000000e+00> : vector<8x128xf32>
      %44 = tpu.matmul %arg11, %43, %cst_52 {dimension_numbers = #tpu.dot_dimension_numbers<[1], [0], [0], [1], [0, 0, 1, 1], [], []>} : vector<8x128xf32>, vector<128x128xf32>, vector<8x128xf32> -> vector<8x128xf32>
      %c0_53 = arith.constant 0 : index
      %c1_54 = arith.constant 1 : index
      %c0_55 = arith.constant 0 : index
      %c0_56 = arith.constant 0 : index
      %45 = vector.load %arg5[%c0_53, %c1_54, %c0_55, %c0_56] : memref<1x3x1x128xf32, #tpu.memory_space<vmem>>, vector<1x1x1x128xf32>
      %46 = vector.shape_cast %45 : vector<1x1x1x128xf32> to vector<1x128xf32>
      %47 = vector.broadcast %46 : vector<1x128xf32> to vector<8x128xf32>
      %48 = arith.addf %44, %47 : vector<8x128xf32>
      %c0_57 = arith.constant 0 : index
      %c2_58 = arith.constant 2 : index
      %c0_59 = arith.constant 0 : index
      %c0_60 = arith.constant 0 : index
      %49 = vector.load %arg3[%c0_57, %c2_58, %c0_59, %c0_60] : memref<1x3x128x128xf32, #tpu.memory_space<vmem>>, vector<1x1x128x128xf32>
      %50 = vector.shape_cast %49 : vector<1x1x128x128xf32> to vector<128x128xf32>
      %cst_61 = arith.constant dense<0.000000e+00> : vector<8x128xf32>
      %51 = tpu.matmul %arg11, %50, %cst_61 {dimension_numbers = #tpu.dot_dimension_numbers<[1], [0], [0], [1], [0, 0, 1, 1], [], []>} : vector<8x128xf32>, vector<128x128xf32>, vector<8x128xf32> -> vector<8x128xf32>
      %c0_62 = arith.constant 0 : index
      %c2_63 = arith.constant 2 : index
      %c0_64 = arith.constant 0 : index
      %c0_65 = arith.constant 0 : index
      %52 = vector.load %arg5[%c0_62, %c2_63, %c0_64, %c0_65] : memref<1x3x1x128xf32, #tpu.memory_space<vmem>>, vector<1x1x1x128xf32>
      %53 = vector.shape_cast %52 : vector<1x1x1x128xf32> to vector<1x128xf32>
      %54 = vector.broadcast %53 : vector<1x128xf32> to vector<8x128xf32>
      %55 = arith.addf %51, %54 : vector<8x128xf32>
      %56 = arith.index_cast %arg10 : i32 to index
      %c0_66 = arith.constant 0 : index
      %c0_67 = arith.constant 0 : index
      %57 = vector.load %arg7[%56, %c0_66, %c0_67] : memref<8x8x128xf32, #tpu.memory_space<vmem>>, vector<1x8x128xf32>
      %58 = vector.shape_cast %57 : vector<1x8x128xf32> to vector<8x128xf32>
      %59 = arith.addf %58, %41 : vector<8x128xf32>
      %60 = arith.negf %59 : vector<8x128xf32>
      %61 = math.exp %60 : vector<8x128xf32>
      %cst_68 = arith.constant 1.000000e+00 : f32
      %62 = vector.broadcast %cst_68 : f32 to vector<8x128xf32>
      %63 = arith.addf %62, %61 : vector<8x128xf32>
      %64 = arith.divf %62, %63 : vector<8x128xf32>
      %65 = arith.index_cast %arg10 : i32 to index
      %c0_69 = arith.constant 0 : index
      %c0_70 = arith.constant 0 : index
      %66 = vector.load %arg8[%65, %c0_69, %c0_70] : memref<8x8x128xf32, #tpu.memory_space<vmem>>, vector<1x8x128xf32>
      %67 = vector.shape_cast %66 : vector<1x8x128xf32> to vector<8x128xf32>
      %68 = arith.addf %67, %48 : vector<8x128xf32>
      %69 = arith.negf %68 : vector<8x128xf32>
      %70 = math.exp %69 : vector<8x128xf32>
      %cst_71 = arith.constant 1.000000e+00 : f32
      %71 = vector.broadcast %cst_71 : f32 to vector<8x128xf32>
      %72 = arith.addf %71, %70 : vector<8x128xf32>
      %73 = arith.divf %71, %72 : vector<8x128xf32>
      %74 = arith.index_cast %arg10 : i32 to index
      %c0_72 = arith.constant 0 : index
      %c0_73 = arith.constant 0 : index
      %75 = vector.load %arg9[%74, %c0_72, %c0_73] : memref<8x8x128xf32, #tpu.memory_space<vmem>>, vector<1x8x128xf32>
      %76 = vector.shape_cast %75 : vector<1x8x128xf32> to vector<8x128xf32>
      %77 = arith.mulf %64, %55 : vector<8x128xf32>
      %78 = arith.addf %76, %77 : vector<8x128xf32>
      %79 = math.tanh %78 : vector<8x128xf32>
      %cst_74 = arith.constant 1.000000e+00 : f32
      %80 = vector.broadcast %cst_74 : f32 to vector<8x128xf32>
      %81 = arith.subf %80, %73 : vector<8x128xf32>
      %82 = arith.mulf %81, %79 : vector<8x128xf32>
      %83 = arith.mulf %73, %arg11 : vector<8x128xf32>
      %84 = arith.addf %82, %83 : vector<8x128xf32>
      %85 = arith.index_cast %arg10 : i32 to index
      %c0_75 = arith.constant 0 : index
      %c0_76 = arith.constant 0 : index
      %86 = vector.load %arg6[%85, %c0_75, %c0_76] : memref<8x8x128xf32, #tpu.memory_space<vmem>>, vector<1x8x128xf32>
      %87 = vector.shape_cast %86 : vector<1x8x128xf32> to vector<8x128xf32>
      %88 = vector.shape_cast %84 : vector<8x128xf32> to vector<1x8x128xf32>
      tpu.vector_store %arg6[%85, %c0_75, %c0_76], %88 {strides = array<i32>} : memref<8x8x128xf32, #tpu.memory_space<vmem>>, vector<1x8x128xf32>,
      scf.yield %84 : vector<8x128xf32>
    }
    %c8_i32_38 = arith.constant 8 : i32
    return
  }
  func.func @transform_0(%arg0: i32) -> (i32, i32, i32) {
    %c0_i32 = arith.constant 0 : i32
    %c0_i32_0 = arith.constant 0 : i32
    %c0_i32_1 = arith.constant 0 : i32
    %c0_i32_2 = arith.constant 0 : i32
    return %c0_i32, %c0_i32_0, %c0_i32_1 : i32, i32, i32
  }
  func.func @transform_1(%arg0: i32) -> (i32, i32, i32, i32) {
    %c0_i32 = arith.constant 0 : i32
    %c0_i32_0 = arith.constant 0 : i32
    %c0_i32_1 = arith.constant 0 : i32
    %c0_i32_2 = arith.constant 0 : i32
    return %arg0, %c0_i32, %c0_i32_0, %c0_i32_1 : i32, i32, i32, i32
  }
  func.func @transform_2(%arg0: i32) -> (i32, i32, i32, i32) {
    %c0_i32 = arith.constant 0 : i32
    %c0_i32_0 = arith.constant 0 : i32
    %c0_i32_1 = arith.constant 0 : i32
    %c0_i32_2 = arith.constant 0 : i32
    return %arg0, %c0_i32, %c0_i32_0, %c0_i32_1 : i32, i32, i32, i32
  }
  func.func @transform_3(%arg0: i32) -> (i32, i32, i32, i32) {
    %c0_i32 = arith.constant 0 : i32
    %c0_i32_0 = arith.constant 0 : i32
    %c0_i32_1 = arith.constant 0 : i32
    %c0_i32_2 = arith.constant 0 : i32
    return %arg0, %c0_i32, %c0_i32_0, %c0_i32_1 : i32, i32, i32, i32
  }
  func.func @transform_4(%arg0: i32) -> (i32, i32, i32, i32) {
    %c0_i32 = arith.constant 0 : i32
    %c0_i32_0 = arith.constant 0 : i32
    %c0_i32_1 = arith.constant 0 : i32
    %c0_i32_2 = arith.constant 0 : i32
    return %arg0, %c0_i32, %c0_i32_0, %c0_i32_1 : i32, i32, i32, i32
  }
  func.func @transform_5(%arg0: i32) -> (i32, i32, i32) {
    %c0_i32 = arith.constant 0 : i32
    %c0_i32_0 = arith.constant 0 : i32
    %c0_i32_1 = arith.constant 0 : i32
    %c0_i32_2 = arith.constant 0 : i32
    return %c0_i32, %c0_i32_0, %c0_i32_1 : i32, i32, i32
  }
}

</mosaic_0001>

<llo_original>
// kernel: tpu_custom_call.1
$region0: #{tpu_custom_call.1}
  #allocation0 [shape = 'u32[]', space=smem, size = 0x4, offset = 0x4, fixed_abs, tag = 'smem constant byte address 0x4 - core index']
  #allocation1 [shape = 'u32[72,128]{1,0:T(1,128)}', space=vmem, size = 0x9000, scoped, tag = 'internal scratch']
  #allocation2 [shape = 'f32[8,8,128]{2,1,0:T(8,128)}', space=vmem, size = 0x8000, scoped, tag = 'scratch operand']
  #allocation3 [shape = 'f32[8,8,128]{2,1,0:T(8,128)}', space=vmem, size = 0x8000, scoped, tag = 'scratch operand']
  #allocation4 [shape = 'f32[8,8,128]{2,1,0:T(8,128)}', space=vmem, size = 0x8000, scoped, tag = 'scratch operand']
  %s0 = inlined_call_operand.hbm [shape: f32[8,8,128], index: 0, kind: input, shape index: {}]
  %s1 = inlined_call_operand.hbm [shape: f32[2,3,128,128], index: 1, kind: input, shape index: {}]
  %s2 = inlined_call_operand.hbm [shape: f32[2,3,128,128], index: 2, kind: input, shape index: {}]
  %s3 = inlined_call_operand.hbm [shape: f32[2,3,1,128], index: 3, kind: input, shape index: {}]
  %s4 = inlined_call_operand.hbm [shape: f32[2,3,1,128], index: 4, kind: input, shape index: {}]
  %s5 = inlined_call_operand.hbm [shape: f32[8,8,128], index: 5, kind: output, shape index: {}]
  %s6 = sld [smem:[#allocation0]]
  $region84: #{tpu_custom_call.1} parent=0
    _
  %s8 = ssub.s32 1, %s6
  %s9 = scalar_select 0, %s8, %s6
  $region1: #{tpu_custom_call.1} parent=0
    #allocation5 [shape = 'u8[32768]{0}', space=vmem, size = 0x8000, scoped, tag = 'input window, operand 0, single buffered']
    #allocation6 [shape = 's32[2]{0}', space=sflag, size = 0x8, scoped, tag = 'scoped memory for tpu_custom_call.1']
    #allocation7 [shape = 's32[2]{0}', space=sflag, size = 0x8, scoped, tag = 'scoped memory for tpu_custom_call.1']
    #allocation8 [shape = 'u8[393216]{0}', space=vmem, size = 0x60000, scoped, tag = 'input window, operand 1']
    #allocation9 [shape = 's32[2]{0}', space=sflag, size = 0x8, scoped, tag = 'scoped memory for tpu_custom_call.1']
    #allocation10 [shape = 'u8[393216]{0}', space=vmem, size = 0x60000, scoped, tag = 'input window, operand 2']
    #allocation11 [shape = 'u8[3072]{0}', space=vmem, size = 0xc00, scoped, tag = 'input window, operand 3']
    #allocation12 [shape = 's32[2]{0}', space=sflag, size = 0x8, scoped, tag = 'scoped memory for tpu_custom_call.1']
    #allocation13 [shape = 'u8[3072]{0}', space=vmem, size = 0xc00, scoped, tag = 'input window, operand 4']
    #allocation14 [shape = 'u8[32768]{0}', space=vmem, size = 0x8000, scoped, tag = 'output window, operand 0, single buffered']
    %10 = vsyncpa [#allocation6], 0
    %11 = vsyncpa [#allocation9], 0
    %s12 = scalar_lea.sflag [#allocation9], 1
    %13 = vsyncpa %s12, 0
    %14 = vsyncpa [#allocation12], 0
    %s15 = scalar_lea.sflag [#allocation12], 1
    %16 = vsyncpa %s15, 0
    %17 = vsyncpa [#allocation7], 0
    loop: start=0, step=1, limit=4
    $region2: #{tpu_custom_call.1} parent=1 // loop_pre_header
      _
    $region3: #{tpu_custom_call.1} parent=1 // loop_header
      %s19 = sphi 0, %s23
      %p20 = scmp.ge.s32.totalorder %s19, 4
      %s27 = sphi 0, %s27
      %s29 = sphi 0, %s27
      %s30 = sphi 0, %s29
      %s44 = sphi 0, %s30
      %s50 = sphi 0, %s52
      %s53 = sphi 0, %s50
      %s54 = sphi 0, %s53
      %s70 = sphi 0, %s54
      %s76 = sphi 0, %s78
      %s79 = sphi 0, %s76
      %s80 = sphi 0, %s79
      %s96 = sphi 0, %s80
      %s102 = sphi 0, %s104
      %s105 = sphi 0, %s102
      %s106 = sphi 0, %s105
      %s122 = sphi 0, %s106
      %s128 = sphi 0, %s130
      %s131 = sphi 0, %s128
      %s132 = sphi 0, %s131
      %s148 = sphi 0, %s132
      %s152 = sphi 0, %s152
      %s154 = sphi 0, %s152
      %s155 = sphi 0, %s154
      %s169 = sphi 0, %s155
    $region4: #{tpu_custom_call.1} parent=1 // loop_header_branch
      %22 = sbr.rel (%p20) target = $region8
    $region5: #{tpu_custom_call.1} parent=1 // loop_body
      %s24 = ssub.s32 %s19, 1
      %s25 = ssub.s32 %s19, 2
      %s26 = sadd.s32 %s19, 1
      %s28 = sadd.s32 %s27, 1
      %p31 = scmp.eq.s32.totalorder %s19, 1
      %p32 = scmp.ne.s32.totalorder %s27, %s29
      %p33 = scmp.eq.s32.totalorder %s19, 0
      %p34 = por %p32, %p33
      %p35 = scmp.ne.s32.totalorder %s27, %s29
      %p36 = scmp.eq.s32.totalorder %s24, 1
      %p37 = por %p35, %p36
      %p38 = scmp.ne.s32.totalorder %s29, %s30
      %p39 = scmp.eq.s32.totalorder %s24, 0
      %p40 = por %p38, %p39
      %p41 = scmp.ne.s32.totalorder %s29, %s30
      %p42 = scmp.eq.s32.totalorder %s25, 1
      %p43 = por %p41, %p42
      %p45 = scmp.ne.s32.totalorder %s30, %s44
      %p46 = scmp.eq.s32.totalorder %s25, 0
      %p47 = por %p45, %p46
      %s48 = ssub.s32 %s19, %s26
      %p49 = scmp.eq.s32.totalorder %s48, 0
      %s51 = sadd.s32 %s50, 1
      %s52 = scalar_select %p49, %s50, %s51
      %p55 = pneg %p49
      %p56 = scmp.eq.s32.totalorder %s19, 1
      %p57 = por %p55, %p56
      %p58 = scmp.ne.s32.totalorder %s50, %s53
      %p59 = scmp.eq.s32.totalorder %s19, 0
      %p60 = por %p58, %p59
      %p61 = scmp.ne.s32.totalorder %s50, %s53
      %p62 = scmp.eq.s32.totalorder %s24, 1
      %p63 = por %p61, %p62
      %p64 = scmp.ne.s32.totalorder %s53, %s54
      %p65 = scmp.eq.s32.totalorder %s24, 0
      %p66 = por %p64, %p65
      %p67 = scmp.ne.s32.totalorder %s53, %s54
      %p68 = scmp.eq.s32.totalorder %s25, 1
      %p69 = por %p67, %p68
      %p71 = scmp.ne.s32.totalorder %s54, %s70
      %p72 = scmp.eq.s32.totalorder %s25, 0
      %p73 = por %p71, %p72
      %s74 = ssub.s32 %s19, %s26
      %p75 = scmp.eq.s32.totalorder %s74, 0
      %s77 = sadd.s32 %s76, 1
      %s78 = scalar_select %p75, %s76, %s77
      %p81 = pneg %p75
      %p82 = scmp.eq.s32.totalorder %s19, 1
      %p83 = por %p81, %p82
      %p84 = scmp.ne.s32.totalorder %s76, %s79
      %p85 = scmp.eq.s32.totalorder %s19, 0
      %p86 = por %p84, %p85
      %p87 = scmp.ne.s32.totalorder %s76, %s79
      %p88 = scmp.eq.s32.totalorder %s24, 1
      %p89 = por %p87, %p88
      %p90 = scmp.ne.s32.totalorder %s79, %s80
      %p91 = scmp.eq.s32.totalorder %s24, 0
      %p92 = por %p90, %p91
      %p93 = scmp.ne.s32.totalorder %s79, %s80
      %p94 = scmp.eq.s32.totalorder %s25, 1
      %p95 = por %p93, %p94
      %p97 = scmp.ne.s32.totalorder %s80, %s96
      %p98 = scmp.eq.s32.totalorder %s25, 0
      %p99 = por %p97, %p98
      %s100 = ssub.s32 %s19, %s26
      %p101 = scmp.eq.s32.totalorder %s100, 0
      %s103 = sadd.s32 %s102, 1
      %s104 = scalar_select %p101, %s102, %s103
      %p107 = pneg %p101
      %p108 = scmp.eq.s32.totalorder %s19, 1
      %p109 = por %p107, %p108
      %p110 = scmp.ne.s32.totalorder %s102, %s105
      %p111 = scmp.eq.s32.totalorder %s19, 0
      %p112 = por %p110, %p111
      %p113 = scmp.ne.s32.totalorder %s102, %s105
      %p114 = scmp.eq.s32.totalorder %s24, 1
      %p115 = por %p113, %p114
      %p116 = scmp.ne.s32.totalorder %s105, %s106
      %p117 = scmp.eq.s32.totalorder %s24, 0
      %p118 = por %p116, %p117
      %p119 = scmp.ne.s32.totalorder %s105, %s106
      %p120 = scmp.eq.s32.totalorder %s25, 1
      %p121 = por %p119, %p120
      %p123 = scmp.ne.s32.totalorder %s106, %s122
      %p124 = scmp.eq.s32.totalorder %s25, 0
      %p125 = por %p123, %p124
      %s126 = ssub.s32 %s19, %s26
      %p127 = scmp.eq.s32.totalorder %s126, 0
      %s129 = sadd.s32 %s128, 1
      %s130 = scalar_select %p127, %s128, %s129
      %p133 = pneg %p127
      %p134 = scmp.eq.s32.totalorder %s19, 1
      %p135 = por %p133, %p134
      %p136 = scmp.ne.s32.totalorder %s128, %s131
      %p137 = scmp.eq.s32.totalorder %s19, 0
      %p138 = por %p136, %p137
      %p139 = scmp.ne.s32.totalorder %s128, %s131
      %p140 = scmp.eq.s32.totalorder %s24, 1
      %p141 = por %p139, %p140
      %p142 = scmp.ne.s32.totalorder %s131, %s132
      %p143 = scmp.eq.s32.totalorder %s24, 0
      %p144 = por %p142, %p143
      %p145 = scmp.ne.s32.totalorder %s131, %s132
      %p146 = scmp.eq.s32.totalorder %s25, 1
      %p147 = por %p145, %p146
      %p149 = scmp.ne.s32.totalorder %s132, %s148
      %p150 = scmp.eq.s32.totalorder %s25, 0
      %p151 = por %p149, %p150
      %s153 = sadd.s32 %s152, 1
      %p156 = scmp.eq.s32.totalorder %s19, 1
      %p157 = scmp.ne.s32.totalorder %s152, %s154
      %p158 = scmp.eq.s32.totalorder %s19, 0
      %p159 = por %p157, %p158
      %p160 = scmp.ne.s32.totalorder %s152, %s154
      %p161 = scmp.eq.s32.totalorder %s24, 1
      %p162 = por %p160, %p161
      %p163 = scmp.ne.s32.totalorder %s154, %s155
      %p164 = scmp.eq.s32.totalorder %s24, 0
      %p165 = por %p163, %p164
      %p166 = scmp.ne.s32.totalorder %s154, %s155
      %p167 = scmp.eq.s32.totalorder %s25, 1
      %p168 = por %p166, %p167
      %p170 = scmp.ne.s32.totalorder %s155, %s169
      %p171 = scmp.eq.s32.totalorder %s25, 0
      %p172 = por %p170, %p171
      %p173 = scmp.le.s32.totalorder 1, %s19
      %p174 = scmp.lt.s32.totalorder %s19, 3
      %p175 = pnand %p173, %p174
      %p176 = pneg %p175
      // Predicated region
      $region9: #{tpu_custom_call.1} parent=5 // pred_check
        _
      $region10: #{tpu_custom_call.1} parent=5 // pred_check_branch
        %178 = sbr.rel (%p175) target = $region12
      $region11: #{tpu_custom_call.1} parent=5 // pred_region
        %s179 = ssub.s32 %s19, 1
        // Predicated region
        $region13: #{tpu_custom_call.1} parent=11 // pred_check
          %p180 = pneg %p40
        $region14: #{tpu_custom_call.1} parent=11 // pred_check_branch
          %182 = sbr.rel (%p180) target = $region16
        $region15: #{tpu_custom_call.1} parent=11 // pred_region
          %184 = vsyncadd [#allocation6], 0
          %s185 = sshll.u32 %s0, 4
          %s186 = int_to_ptr.hbm [resolvable:$true] %s185
          %s187 = sshll.u32 [#allocation5], 4
          %s188 = int_to_ptr.vmem [resolvable:$true] %s187
          %193 = dma.hbm_to_vmem [thread:$0]  %s186, 1024, %s188, [#allocation6], 128, 128, 8
        $region16: #{tpu_custom_call.1} parent=11 // pred_fallthru
          _
      $region12: #{tpu_custom_call.1} parent=5 // pred_fallthru
        _
      %p194 = scmp.lt.s32.totalorder %s19, 2
      // Predicated region
      $region17: #{tpu_custom_call.1} parent=5 // pred_check
        %p195 = pneg %p194
      $region18: #{tpu_custom_call.1} parent=5 // pred_check_branch
        %197 = sbr.rel (%p195) target = $region20
      $region19: #{tpu_custom_call.1} parent=5 // pred_region
        // Predicated region
        $region21: #{tpu_custom_call.1} parent=19 // pred_check
          %p198 = pneg %p60
        $region22: #{tpu_custom_call.1} parent=19 // pred_check_branch
          %200 = sbr.rel (%p198) target = $region24
        $region23: #{tpu_custom_call.1} parent=19 // pred_region
          %s201 = sand.u32 %s19, 1
          %s202 = scalar_lea.sflag [#allocation9], %s201
          %s203 = sand.u32 %s50, 1
          %s204 = smul.addr %s203, 384
          %s205 = scalar_lea.vmem [#allocation8], %s204
          %207 = vsyncadd %s202, 0
          %s208 = smul.addr %s19, 48
          %s209 = smul.addr %s208, 8
          %s210 = scalar_lea.hbm %s1, %s209
          %s211 = sshll.u32 %s210, 4
          %s212 = int_to_ptr.hbm [resolvable:$true] %s211
          %s213 = sshll.u32 %s205, 4
          %s214 = int_to_ptr.vmem [resolvable:$true] %s213
          %219 = dma.hbm_to_vmem [thread:$0]  %s212, 6144, %s214, %s202, 128, 128, 8
        $region24: #{tpu_custom_call.1} parent=19 // pred_fallthru
          _
        // Predicated region
        $region25: #{tpu_custom_call.1} parent=19 // pred_check
          %p220 = pneg %p86
        $region26: #{tpu_custom_call.1} parent=19 // pred_check_branch
          %222 = sbr.rel (%p220) target = $region28
        $region27: #{tpu_custom_call.1} parent=19 // pred_region
          %s223 = sand.u32 %s19, 1
          %s224 = scalar_lea.sflag [#allocation9], %s223
          %s225 = sand.u32 %s76, 1
          %s226 = smul.addr %s225, 384
          %s227 = scalar_lea.vmem [#allocation10], %s226
          %229 = vsyncadd %s224, 0
          %s230 = smul.addr %s19, 48
          %s231 = smul.addr %s230, 8
          %s232 = scalar_lea.hbm %s2, %s231
          %s233 = sshll.u32 %s232, 4
          %s234 = int_to_ptr.hbm [resolvable:$true] %s233
          %s235 = sshll.u32 %s227, 4
          %s236 = int_to_ptr.vmem [resolvable:$true] %s235
          %241 = dma.hbm_to_vmem [thread:$0]  %s234, 6144, %s236, %s224, 128, 128, 8
        $region28: #{tpu_custom_call.1} parent=19 // pred_fallthru
          _
        // Predicated region
        $region29: #{tpu_custom_call.1} parent=19 // pred_check
          %p242 = pneg %p112
        $region30: #{tpu_custom_call.1} parent=19 // pred_check_branch
          %244 = sbr.rel (%p242) target = $region32
        $region31: #{tpu_custom_call.1} parent=19 // pred_region
          %s245 = sand.u32 %s19, 1
          %s246 = scalar_lea.sflag [#allocation12], %s245
          %s247 = sand.u32 %s102, 1
          %s248 = smul.addr %s247, 3
          %s249 = scalar_lea.vmem [#allocation11], %s248
          %251 = vsyncadd %s246, 0
          %s252 = smul.addr %s19, 3
          %s253 = scalar_lea.hbm %s3, %s252
          %s254 = sshll.u32 %s253, 4
          %s255 = int_to_ptr.hbm [resolvable:$true] %s254
          %s256 = sshll.u32 %s249, 4
          %s257 = int_to_ptr.vmem [resolvable:$true] %s256
          %262 = dma.hbm_to_vmem [thread:$0]  %s255, 48, %s257, %s246, 16, 16, 1
        $region32: #{tpu_custom_call.1} parent=19 // pred_fallthru
          _
        // Predicated region
        $region33: #{tpu_custom_call.1} parent=19 // pred_check
          %p263 = pneg %p138
        $region34: #{tpu_custom_call.1} parent=19 // pred_check_branch
          %265 = sbr.rel (%p263) target = $region36
        $region35: #{tpu_custom_call.1} parent=19 // pred_region
          %s266 = sand.u32 %s19, 1
          %s267 = scalar_lea.sflag [#allocation12], %s266
          %s268 = sand.u32 %s128, 1
          %s269 = smul.addr %s268, 3
          %s270 = scalar_lea.vmem [#allocation13], %s269
          %272 = vsyncadd %s267, 0
          %s273 = smul.addr %s19, 3
          %s274 = scalar_lea.hbm %s4, %s273
          %s275 = sshll.u32 %s274, 4
          %s276 = int_to_ptr.hbm [resolvable:$true] %s275
          %s277 = sshll.u32 %s270, 4
          %s278 = int_to_ptr.vmem [resolvable:$true] %s277
          %283 = dma.hbm_to_vmem [thread:$0]  %s276, 48, %s278, %s267, 16, 16, 1
        $region36: #{tpu_custom_call.1} parent=19 // pred_fallthru
          _
      $region20: #{tpu_custom_call.1} parent=5 // pred_fallthru
        _
      %p284 = scmp.le.s32.totalorder 1, %s19
      %p285 = scmp.lt.s32.totalorder %s19, 3
      %p286 = pnand %p284, %p285
      %p287 = pneg %p286
      // Predicated region
      $region37: #{tpu_custom_call.1} parent=5 // pred_check
        _
      $region38: #{tpu_custom_call.1} parent=5 // pred_check_branch
        %289 = sbr.rel (%p286) target = $region40
      $region39: #{tpu_custom_call.1} parent=5 // pred_region
        %s290 = ssub.s32 %s19, 1
        // Predicated region
        $region41: #{tpu_custom_call.1} parent=39 // pred_check
          %p291 = pneg %p40
        $region42: #{tpu_custom_call.1} parent=39 // pred_check_branch
          %293 = sbr.rel (%p291) target = $region44
        $region43: #{tpu_custom_call.1} parent=39 // pred_region
          %295 = dma.done [#allocation6], 1024
        $region44: #{tpu_custom_call.1} parent=39 // pred_fallthru
          _
        %s296 = sand.u32 %s24, 1
        %s297 = scalar_lea.sflag [#allocation9], %s296
        %s298 = sand.u32 %s53, 1
        %s299 = smul.addr %s298, 384
        %s300 = scalar_lea.vmem [#allocation8], %s299
        // Predicated region
        $region45: #{tpu_custom_call.1} parent=39 // pred_check
          %p301 = pneg %p66
        $region46: #{tpu_custom_call.1} parent=39 // pred_check_branch
          %303 = sbr.rel (%p301) target = $region48
        $region47: #{tpu_custom_call.1} parent=39 // pred_region
          %305 = dma.done %s297, 6144
        $region48: #{tpu_custom_call.1} parent=39 // pred_fallthru
          _
        %s306 = sand.u32 %s24, 1
        %s307 = scalar_lea.sflag [#allocation9], %s306
        %s308 = sand.u32 %s79, 1
        %s309 = smul.addr %s308, 384
        %s310 = scalar_lea.vmem [#allocation10], %s309
        // Predicated region
        $region49: #{tpu_custom_call.1} parent=39 // pred_check
          %p311 = pneg %p92
        $region50: #{tpu_custom_call.1} parent=39 // pred_check_branch
          %313 = sbr.rel (%p311) target = $region52
        $region51: #{tpu_custom_call.1} parent=39 // pred_region
          %315 = dma.done %s307, 6144
        $region52: #{tpu_custom_call.1} parent=39 // pred_fallthru
          _
        %s316 = sand.u32 %s24, 1
        %s317 = scalar_lea.sflag [#allocation12], %s316
        %s318 = sand.u32 %s105, 1
        %s319 = smul.addr %s318, 3
        %s320 = scalar_lea.vmem [#allocation11], %s319
        // Predicated region
        $region53: #{tpu_custom_call.1} parent=39 // pred_check
          %p321 = pneg %p118
        $region54: #{tpu_custom_call.1} parent=39 // pred_check_branch
          %323 = sbr.rel (%p321) target = $region56
        $region55: #{tpu_custom_call.1} parent=39 // pred_region
          %325 = dma.done %s317, 48
        $region56: #{tpu_custom_call.1} parent=39 // pred_fallthru
          _
        %s326 = sand.u32 %s24, 1
        %s327 = scalar_lea.sflag [#allocation12], %s326
        %s328 = sand.u32 %s131, 1
        %s329 = smul.addr %s328, 3
        %s330 = scalar_lea.vmem [#allocation13], %s329
        // Predicated region
        $region57: #{tpu_custom_call.1} parent=39 // pred_check
          %p331 = pneg %p144
        $region58: #{tpu_custom_call.1} parent=39 // pred_check_branch
          %333 = sbr.rel (%p331) target = $region60
        $region59: #{tpu_custom_call.1} parent=39 // pred_region
          %335 = dma.done %s327, 48
        $region60: #{tpu_custom_call.1} parent=39 // pred_fallthru
          _
        %p336 = pneg %p40
        %p337 = pneg %p37
        %s338 = sand.u32 %s24, 1
        %s339 = scalar_lea.sflag [#allocation9], %s338
        %s340 = sand.u32 %s53, 1
        %s341 = smul.addr %s340, 384
        %s342 = scalar_lea.vmem [#allocation8], %s341
        %p343 = pneg %p66
        %p344 = pneg %p63
        %s345 = sand.u32 %s24, 1
        %s346 = scalar_lea.sflag [#allocation9], %s345
        %s347 = sand.u32 %s79, 1
        %s348 = smul.addr %s347, 384
        %s349 = scalar_lea.vmem [#allocation10], %s348
        %p350 = pneg %p92
        %p351 = pneg %p89
        %s352 = sand.u32 %s24, 1
        %s353 = scalar_lea.sflag [#allocation12], %s352
        %s354 = sand.u32 %s105, 1
        %s355 = smul.addr %s354, 3
        %s356 = scalar_lea.vmem [#allocation11], %s355
        %p357 = pneg %p118
        %p358 = pneg %p115
        %s359 = sand.u32 %s24, 1
        %s360 = scalar_lea.sflag [#allocation12], %s359
        %s361 = sand.u32 %s131, 1
        %s362 = smul.addr %s361, 3
        %s363 = scalar_lea.vmem [#allocation13], %s362
        %p364 = pneg %p144
        %p365 = pneg %p141
        %p366 = pneg %p165
        %p367 = pneg %p162
        %p368 = scmp.eq.s32.totalorder %s24, 0
        // Predicated region
        $region61: #{tpu_custom_call.1} parent=39 // pred_check
          %p369 = pneg %p368
        $region62: #{tpu_custom_call.1} parent=39 // pred_check_branch
          %371 = sbr.rel (%p369) target = $region64
        $region63: #{tpu_custom_call.1} parent=39 // pred_region
          %v372 = vld [vmem:[#allocation5] sm:$0xff]
          %v373 = vld [vmem:[#allocation5 + $0x8] sm:$0xff]
          %v374 = vld [vmem:[#allocation5 + $0x10] sm:$0xff]
          %v375 = vld [vmem:[#allocation5 + $0x18] sm:$0xff]
          %v376 = vld [vmem:[#allocation5 + $0x20] sm:$0xff]
          %v377 = vld [vmem:[#allocation5 + $0x28] sm:$0xff]
          %v378 = vld [vmem:[#allocation5 + $0x30] sm:$0xff]
          %v379 = vld [vmem:[#allocation5 + $0x38] sm:$0xff]
          %380 = vst [vmem:[#allocation14] sm:$0xff] %v372
          %381 = vst [vmem:[#allocation14 + $0x8] sm:$0xff] %v373
          %382 = vst [vmem:[#allocation14 + $0x10] sm:$0xff] %v374
          %383 = vst [vmem:[#allocation14 + $0x18] sm:$0xff] %v375
          %384 = vst [vmem:[#allocation14 + $0x20] sm:$0xff] %v376
          %385 = vst [vmem:[#allocation14 + $0x28] sm:$0xff] %v377
          %386 = vst [vmem:[#allocation14 + $0x30] sm:$0xff] %v378
          %387 = vst [vmem:[#allocation14 + $0x38] sm:$0xff] %v379
        $region64: #{tpu_custom_call.1} parent=39 // pred_fallthru
          _
        %v388 = vld [vmem:[#allocation14] sm:$0xff]
        %v389 = vld [vmem:[#allocation14 + $0x8] sm:$0xff]
        %v390 = vld [vmem:[#allocation14 + $0x10] sm:$0xff]
        %v391 = vld [vmem:[#allocation14 + $0x18] sm:$0xff]
        %v392 = vld [vmem:[#allocation14 + $0x20] sm:$0xff]
        %v393 = vld [vmem:[#allocation14 + $0x28] sm:$0xff]
        %v394 = vld [vmem:[#allocation14 + $0x30] sm:$0xff]
        %v395 = vld [vmem:[#allocation14 + $0x38] sm:$0xff]
        %v396 = vld [vmem:[%s300] sm:$0xff]
        %v397 = vld [vmem:[%s300 + $0x8] sm:$0xff]
        %v398 = vld [vmem:[%s300 + $0x10] sm:$0xff]
        %v399 = vld [vmem:[%s300 + $0x18] sm:$0xff]
        %v400 = vld [vmem:[%s300 + $0x20] sm:$0xff]
        %v401 = vld [vmem:[%s300 + $0x28] sm:$0xff]
        %v402 = vld [vmem:[%s300 + $0x30] sm:$0xff]
        %v403 = vld [vmem:[%s300 + $0x38] sm:$0xff]
        %v404 = vld [vmem:[%s300 + $0x40] sm:$0xff]
        %v405 = vld [vmem:[%s300 + $0x48] sm:$0xff]
        %v406 = vld [vmem:[%s300 + $0x50] sm:$0xff]
        %v407 = vld [vmem:[%s300 + $0x58] sm:$0xff]
        %v408 = vld [vmem:[%s300 + $0x60] sm:$0xff]
        %v409 = vld [vmem:[%s300 + $0x68] sm:$0xff]
        %v410 = vld [vmem:[%s300 + $0x70] sm:$0xff]
        %v411 = vld [vmem:[%s300 + $0x78] sm:$0xff]
        %v412 = vld [vmem:[%s320] sm:$0x1]
        %v414 = vperm.slane %v412, 0
        %416 = vmatpush.msra.mxu0 %v411
        %417 = vmatpush.msra.mxu0 %v410
        %418 = vmatpush.msra.mxu0 %v409
        %419 = vmatpush.msra.mxu0 %v408
        %420 = vmatpush.msra.mxu0 %v407
        %421 = vmatpush.msra.mxu0 %v406
        %422 = vmatpush.msra.mxu0 %v405
        %423 = vmatpush.msra.mxu0 %v404
        %424 = vmatpush.msra.mxu0 %v403
        %425 = vmatpush.msra.mxu0 %v402
        %426 = vmatpush.msra.mxu0 %v401
        %427 = vmatpush.msra.mxu0 %v400
        %428 = vmatpush.msra.mxu0 %v399
        %429 = vmatpush.msra.mxu0 %v398
        %430 = vmatpush.msra.mxu0 %v397
        %431 = vmatpush.msra.mxu0 %v396
        %432 = vmatmul.f32.gmra.mxu0 %v388
        %v433 = vpop.f32.mrf.mxu0
        %v434 = vadd.f32 %v414, %v433
        %435 = vmatmul.f32.gmra.mxu0 %v389
        %v436 = vpop.f32.mrf.mxu0
        %v437 = vadd.f32 %v414, %v436
        %438 = vmatmul.f32.gmra.mxu0 %v390
        %v439 = vpop.f32.mrf.mxu0
        %v440 = vadd.f32 %v414, %v439
        %441 = vmatmul.f32.gmra.mxu0 %v391
        %v442 = vpop.f32.mrf.mxu0
        %v443 = vadd.f32 %v414, %v442
        %444 = vmatmul.f32.gmra.mxu0 %v392
        %v445 = vpop.f32.mrf.mxu0
        %v446 = vadd.f32 %v414, %v445
        %447 = vmatmul.f32.gmra.mxu0 %v393
        %v448 = vpop.f32.mrf.mxu0
        %v449 = vadd.f32 %v414, %v448
        %450 = vmatmul.f32.gmra.mxu0 %v394
        %v451 = vpop.f32.mrf.mxu0
        %v452 = vadd.f32 %v414, %v451
        %453 = vmatmul.f32.gmra.mxu0 %v395
        %v454 = vpop.f32.mrf.mxu0
        %v455 = vadd.f32 %v414, %v454
        %456 = vdwg.mxu0
        %457 = vst [vmem:[#allocation2] sm:$0xff] %v434
        %458 = vst [vmem:[#allocation2 + $0x8] sm:$0xff] %v437
        %459 = vst [vmem:[#allocation2 + $0x10] sm:$0xff] %v440
        %460 = vst [vmem:[#allocation2 + $0x18] sm:$0xff] %v443
        %461 = vst [vmem:[#allocation2 + $0x20] sm:$0xff] %v446
        %462 = vst [vmem:[#allocation2 + $0x28] sm:$0xff] %v449
        %463 = vst [vmem:[#allocation2 + $0x30] sm:$0xff] %v452
        %464 = vst [vmem:[#allocation2 + $0x38] sm:$0xff] %v455
        %s465 = scalar_lea.vmem %s300, 128 [#allocation8]
        %v466 = vld [vmem:[%s465] sm:$0xff]
        %v467 = vld [vmem:[%s465 + $0x8] sm:$0xff]
        %v468 = vld [vmem:[%s465 + $0x10] sm:$0xff]
        %v469 = vld [vmem:[%s465 + $0x18] sm:$0xff]
        %v470 = vld [vmem:[%s465 + $0x20] sm:$0xff]
        %v471 = vld [vmem:[%s465 + $0x28] sm:$0xff]
        %v472 = vld [vmem:[%s465 + $0x30] sm:$0xff]
        %v473 = vld [vmem:[%s465 + $0x38] sm:$0xff]
        %v474 = vld [vmem:[%s465 + $0x40] sm:$0xff]
        %v475 = vld [vmem:[%s465 + $0x48] sm:$0xff]
        %v476 = vld [vmem:[%s465 + $0x50] sm:$0xff]
        %v477 = vld [vmem:[%s465 + $0x58] sm:$0xff]
        %v478 = vld [vmem:[%s465 + $0x60] sm:$0xff]
        %v479 = vld [vmem:[%s465 + $0x68] sm:$0xff]
        %v480 = vld [vmem:[%s465 + $0x70] sm:$0xff]
        %v481 = vld [vmem:[%s465 + $0x78] sm:$0xff]
        %s482 = scalar_lea.vmem %s320, 1 [#allocation11]
        %v483 = vld [vmem:[%s482] sm:$0x1]
        %v485 = vperm.slane %v483, 0
        %487 = vmatpush.msra.mxu0 %v481
        %488 = vmatpush.msra.mxu0 %v480
        %489 = vmatpush.msra.mxu0 %v479
        %490 = vmatpush.msra.mxu0 %v478
        %491 = vmatpush.msra.mxu0 %v477
        %492 = vmatpush.msra.mxu0 %v476
        %493 = vmatpush.msra.mxu0 %v475
        %494 = vmatpush.msra.mxu0 %v474
        %495 = vmatpush.msra.mxu0 %v473
        %496 = vmatpush.msra.mxu0 %v472
        %497 = vmatpush.msra.mxu0 %v471
        %498 = vmatpush.msra.mxu0 %v470
        %499 = vmatpush.msra.mxu0 %v469
        %500 = vmatpush.msra.mxu0 %v468
        %501 = vmatpush.msra.mxu0 %v467
        %502 = vmatpush.msra.mxu0 %v466
        %503 = vmatmul.f32.gmra.mxu0 %v388
        %v504 = vpop.f32.mrf.mxu0
        %v505 = vadd.f32 %v485, %v504
        %506 = vmatmul.f32.gmra.mxu0 %v389
        %v507 = vpop.f32.mrf.mxu0
        %v508 = vadd.f32 %v485, %v507
        %509 = vmatmul.f32.gmra.mxu0 %v390
        %v510 = vpop.f32.mrf.mxu0
        %v511 = vadd.f32 %v485, %v510
        %512 = vmatmul.f32.gmra.mxu0 %v391
        %v513 = vpop.f32.mrf.mxu0
        %v514 = vadd.f32 %v485, %v513
        %515 = vmatmul.f32.gmra.mxu0 %v392
        %v516 = vpop.f32.mrf.mxu0
        %v517 = vadd.f32 %v485, %v516
        %518 = vmatmul.f32.gmra.mxu0 %v393
        %v519 = vpop.f32.mrf.mxu0
        %v520 = vadd.f32 %v485, %v519
        %521 = vmatmul.f32.gmra.mxu0 %v394
        %v522 = vpop.f32.mrf.mxu0
        %v523 = vadd.f32 %v485, %v522
        %524 = vmatmul.f32.gmra.mxu0 %v395
        %v525 = vpop.f32.mrf.mxu0
        %v526 = vadd.f32 %v485, %v525
        %527 = vdwg.mxu0
        %528 = vst [vmem:[#allocation3] sm:$0xff] %v505
        %529 = vst [vmem:[#allocation3 + $0x8] sm:$0xff] %v508
        %530 = vst [vmem:[#allocation3 + $0x10] sm:$0xff] %v511
        %531 = vst [vmem:[#allocation3 + $0x18] sm:$0xff] %v514
        %532 = vst [vmem:[#allocation3 + $0x20] sm:$0xff] %v517
        %533 = vst [vmem:[#allocation3 + $0x28] sm:$0xff] %v520
        %534 = vst [vmem:[#allocation3 + $0x30] sm:$0xff] %v523
        %535 = vst [vmem:[#allocation3 + $0x38] sm:$0xff] %v526
        %s536 = scalar_lea.vmem %s300, 256 [#allocation8]
        %v537 = vld [vmem:[%s536] sm:$0xff]
        %v538 = vld [vmem:[%s536 + $0x8] sm:$0xff]
        %v539 = vld [vmem:[%s536 + $0x10] sm:$0xff]
        %v540 = vld [vmem:[%s536 + $0x18] sm:$0xff]
        %v541 = vld [vmem:[%s536 + $0x20] sm:$0xff]
        %v542 = vld [vmem:[%s536 + $0x28] sm:$0xff]
        %v543 = vld [vmem:[%s536 + $0x30] sm:$0xff]
        %v544 = vld [vmem:[%s536 + $0x38] sm:$0xff]
        %v545 = vld [vmem:[%s536 + $0x40] sm:$0xff]
        %v546 = vld [vmem:[%s536 + $0x48] sm:$0xff]
        %v547 = vld [vmem:[%s536 + $0x50] sm:$0xff]
        %v548 = vld [vmem:[%s536 + $0x58] sm:$0xff]
        %v549 = vld [vmem:[%s536 + $0x60] sm:$0xff]
        %v550 = vld [vmem:[%s536 + $0x68] sm:$0xff]
        %v551 = vld [vmem:[%s536 + $0x70] sm:$0xff]
        %v552 = vld [vmem:[%s536 + $0x78] sm:$0xff]
        %s553 = scalar_lea.vmem %s320, 2 [#allocation11]
        %v554 = vld [vmem:[%s553] sm:$0x1]
        %v556 = vperm.slane %v554, 0
        %558 = vmatpush.msra.mxu0 %v552
        %559 = vmatpush.msra.mxu0 %v551
        %560 = vmatpush.msra.mxu0 %v550
        %561 = vmatpush.msra.mxu0 %v549
        %562 = vmatpush.msra.mxu0 %v548
        %563 = vmatpush.msra.mxu0 %v547
        %564 = vmatpush.msra.mxu0 %v546
        %565 = vmatpush.msra.mxu0 %v545
        %566 = vmatpush.msra.mxu0 %v544
        %567 = vmatpush.msra.mxu0 %v543
        %568 = vmatpush.msra.mxu0 %v542
        %569 = vmatpush.msra.mxu0 %v541
        %570 = vmatpush.msra.mxu0 %v540
        %571 = vmatpush.msra.mxu0 %v539
        %572 = vmatpush.msra.mxu0 %v538
        %573 = vmatpush.msra.mxu0 %v537
        %574 = vmatmul.f32.gmra.mxu0 %v388
        %v575 = vpop.f32.mrf.mxu0
        %v576 = vadd.f32 %v556, %v575
        %577 = vmatmul.f32.gmra.mxu0 %v389
        %v578 = vpop.f32.mrf.mxu0
        %v579 = vadd.f32 %v556, %v578
        %580 = vmatmul.f32.gmra.mxu0 %v390
        %v581 = vpop.f32.mrf.mxu0
        %v582 = vadd.f32 %v556, %v581
        %583 = vmatmul.f32.gmra.mxu0 %v391
        %v584 = vpop.f32.mrf.mxu0
        %v585 = vadd.f32 %v556, %v584
        %586 = vmatmul.f32.gmra.mxu0 %v392
        %v587 = vpop.f32.mrf.mxu0
        %v588 = vadd.f32 %v556, %v587
        %589 = vmatmul.f32.gmra.mxu0 %v393
        %v590 = vpop.f32.mrf.mxu0
        %v591 = vadd.f32 %v556, %v590
        %592 = vmatmul.f32.gmra.mxu0 %v394
        %v593 = vpop.f32.mrf.mxu0
        %v594 = vadd.f32 %v556, %v593
        %595 = vmatmul.f32.gmra.mxu0 %v395
        %v596 = vpop.f32.mrf.mxu0
        %v597 = vadd.f32 %v556, %v596
        %598 = vdwg.mxu0
        %599 = vst [vmem:[#allocation4] sm:$0xff] %v576
        %600 = vst [vmem:[#allocation4 + $0x8] sm:$0xff] %v579
        %601 = vst [vmem:[#allocation4 + $0x10] sm:$0xff] %v582
        %602 = vst [vmem:[#allocation4 + $0x18] sm:$0xff] %v585
        %603 = vst [vmem:[#allocation4 + $0x20] sm:$0xff] %v588
        %604 = vst [vmem:[#allocation4 + $0x28] sm:$0xff] %v591
        %605 = vst [vmem:[#allocation4 + $0x30] sm:$0xff] %v594
        %606 = vst [vmem:[#allocation4 + $0x38] sm:$0xff] %v597
        loop: start=0, step=1, limit=8
        $region65: #{tpu_custom_call.1} parent=39 // loop_pre_header
          _
        $region66: #{tpu_custom_call.1} parent=39 // loop_header
          %s608 = sphi 0, %s612
          %p609 = scmp.ge.s32.totalorder %s608, 8
          %v613 = vphi 0.0, %v791
        $region67: #{tpu_custom_call.1} parent=39 // loop_header_branch
          %611 = sbr.rel (%p609) target = $region71
        $region68: #{tpu_custom_call.1} parent=39 // loop_body
          %v614 = vld [vmem:[%s310] sm:$0xff]
          %v615 = vld [vmem:[%s310 + $0x8] sm:$0xff]
          %v616 = vld [vmem:[%s310 + $0x10] sm:$0xff]
          %v617 = vld [vmem:[%s310 + $0x18] sm:$0xff]
          %v618 = vld [vmem:[%s310 + $0x20] sm:$0xff]
          %v619 = vld [vmem:[%s310 + $0x28] sm:$0xff]
          %v620 = vld [vmem:[%s310 + $0x30] sm:$0xff]
          %v621 = vld [vmem:[%s310 + $0x38] sm:$0xff]
          %v622 = vld [vmem:[%s310 + $0x40] sm:$0xff]
          %v623 = vld [vmem:[%s310 + $0x48] sm:$0xff]
          %v624 = vld [vmem:[%s310 + $0x50] sm:$0xff]
          %v625 = vld [vmem:[%s310 + $0x58] sm:$0xff]
          %v626 = vld [vmem:[%s310 + $0x60] sm:$0xff]
          %v627 = vld [vmem:[%s310 + $0x68] sm:$0xff]
          %v628 = vld [vmem:[%s310 + $0x70] sm:$0xff]
          %v629 = vld [vmem:[%s310 + $0x78] sm:$0xff]
          %v630 = vld [vmem:[%s330] sm:$0x1]
          %v632 = vperm.slane %v630, 0
          %634 = vmatpush.msra.mxu0 %v629
          %635 = vmatpush.msra.mxu0 %v628
          %636 = vmatpush.msra.mxu0 %v627
          %637 = vmatpush.msra.mxu0 %v626
          %638 = vmatpush.msra.mxu0 %v625
          %639 = vmatpush.msra.mxu0 %v624
          %640 = vmatpush.msra.mxu0 %v623
          %641 = vmatpush.msra.mxu0 %v622
          %642 = vmatpush.msra.mxu0 %v621
          %643 = vmatpush.msra.mxu0 %v620
          %644 = vmatpush.msra.mxu0 %v619
          %645 = vmatpush.msra.mxu0 %v618
          %646 = vmatpush.msra.mxu0 %v617
          %647 = vmatpush.msra.mxu0 %v616
          %648 = vmatpush.msra.mxu0 %v615
          %649 = vmatpush.msra.mxu0 %v614
          %650 = vmatmul.f32.gmra.mxu0 %v613
          %v651 = vpop.f32.mrf.mxu0
          %v652 = vadd.f32 %v632, %v651
          %653 = vdwg.mxu0
          %s654 = scalar_lea.vmem %s310, 128 [#allocation10]
          %v655 = vld [vmem:[%s654] sm:$0xff]
          %v656 = vld [vmem:[%s654 + $0x8] sm:$0xff]
          %v657 = vld [vmem:[%s654 + $0x10] sm:$0xff]
          %v658 = vld [vmem:[%s654 + $0x18] sm:$0xff]
          %v659 = vld [vmem:[%s654 + $0x20] sm:$0xff]
          %v660 = vld [vmem:[%s654 + $0x28] sm:$0xff]
          %v661 = vld [vmem:[%s654 + $0x30] sm:$0xff]
          %v662 = vld [vmem:[%s654 + $0x38] sm:$0xff]
          %v663 = vld [vmem:[%s654 + $0x40] sm:$0xff]
          %v664 = vld [vmem:[%s654 + $0x48] sm:$0xff]
          %v665 = vld [vmem:[%s654 + $0x50] sm:$0xff]
          %v666 = vld [vmem:[%s654 + $0x58] sm:$0xff]
          %v667 = vld [vmem:[%s654 + $0x60] sm:$0xff]
          %v668 = vld [vmem:[%s654 + $0x68] sm:$0xff]
          %v669 = vld [vmem:[%s654 + $0x70] sm:$0xff]
          %v670 = vld [vmem:[%s654 + $0x78] sm:$0xff]
          %s671 = scalar_lea.vmem %s330, 1 [#allocation13]
          %v672 = vld [vmem:[%s671] sm:$0x1]
          %v674 = vperm.slane %v672, 0
          %676 = vmatpush.msra.mxu0 %v670
          %677 = vmatpush.msra.mxu0 %v669
          %678 = vmatpush.msra.mxu0 %v668
          %679 = vmatpush.msra.mxu0 %v667
          %680 = vmatpush.msra.mxu0 %v666
          %681 = vmatpush.msra.mxu0 %v665
          %682 = vmatpush.msra.mxu0 %v664
          %683 = vmatpush.msra.mxu0 %v663
          %684 = vmatpush.msra.mxu0 %v662
          %685 = vmatpush.msra.mxu0 %v661
          %686 = vmatpush.msra.mxu0 %v660
          %687 = vmatpush.msra.mxu0 %v659
          %688 = vmatpush.msra.mxu0 %v658
          %689 = vmatpush.msra.mxu0 %v657
          %690 = vmatpush.msra.mxu0 %v656
          %691 = vmatpush.msra.mxu0 %v655
          %692 = vmatmul.f32.gmra.mxu0 %v613
          %v693 = vpop.f32.mrf.mxu0
          %v694 = vadd.f32 %v674, %v693
          %695 = vdwg.mxu0
          %s696 = scalar_lea.vmem %s310, 256 [#allocation10]
          %v697 = vld [vmem:[%s696] sm:$0xff]
          %v698 = vld [vmem:[%s696 + $0x8] sm:$0xff]
          %v699 = vld [vmem:[%s696 + $0x10] sm:$0xff]
          %v700 = vld [vmem:[%s696 + $0x18] sm:$0xff]
          %v701 = vld [vmem:[%s696 + $0x20] sm:$0xff]
          %v702 = vld [vmem:[%s696 + $0x28] sm:$0xff]
          %v703 = vld [vmem:[%s696 + $0x30] sm:$0xff]
          %v704 = vld [vmem:[%s696 + $0x38] sm:$0xff]
          %v705 = vld [vmem:[%s696 + $0x40] sm:$0xff]
          %v706 = vld [vmem:[%s696 + $0x48] sm:$0xff]
          %v707 = vld [vmem:[%s696 + $0x50] sm:$0xff]
          %v708 = vld [vmem:[%s696 + $0x58] sm:$0xff]
          %v709 = vld [vmem:[%s696 + $0x60] sm:$0xff]
          %v710 = vld [vmem:[%s696 + $0x68] sm:$0xff]
          %v711 = vld [vmem:[%s696 + $0x70] sm:$0xff]
          %v712 = vld [vmem:[%s696 + $0x78] sm:$0xff]
          %s713 = scalar_lea.vmem %s330, 2 [#allocation13]
          %v714 = vld [vmem:[%s713] sm:$0x1]
          %v716 = vperm.slane %v714, 0
          %718 = vmatpush.msra.mxu0 %v712
          %719 = vmatpush.msra.mxu0 %v711
          %720 = vmatpush.msra.mxu0 %v710
          %721 = vmatpush.msra.mxu0 %v709
          %722 = vmatpush.msra.mxu0 %v708
          %723 = vmatpush.msra.mxu0 %v707
          %724 = vmatpush.msra.mxu0 %v706
          %725 = vmatpush.msra.mxu0 %v705
          %726 = vmatpush.msra.mxu0 %v704
          %727 = vmatpush.msra.mxu0 %v703
          %728 = vmatpush.msra.mxu0 %v702
          %729 = vmatpush.msra.mxu0 %v701
          %730 = vmatpush.msra.mxu0 %v700
          %731 = vmatpush.msra.mxu0 %v699
          %732 = vmatpush.msra.mxu0 %v698
          %733 = vmatpush.msra.mxu0 %v697
          %734 = vmatmul.f32.gmra.mxu0 %v613
          %v735 = vpop.f32.mrf.mxu0
          %v736 = vadd.f32 %v716, %v735
          %737 = vdwg.mxu0
          %s738 = smul.u32 %s608, 8
          %s739 = scalar_lea.vmem [#allocation2], %s738
          %v740 = vld [vmem:[%s739] sm:$0xff]
          %v741 = vadd.f32 %v740, %v652
          %v742 = vxor.u32 %v741, 2147483648
          %v743 = vmul.f32 %v742, 1.442695
          %v744 = vpow.pop %v743
          %v745 = vadd.f32 %v744, 1.0
          %v746 = vrcp.pop %v745
          %v747 = vmul.f32 %v745, %v746
          %v748 = vsub.f32 1.0, %v747
          %v749 = vmul.f32 %v746, %v748
          %v750 = vadd.f32 %v746, %v749
          %vm751 = vweird.f32 %v745
          %vm752 = vweird.f32 %v746
          %vm753 = vmor %vm751, %vm752
          %v754 = vsel %vm753, %v746, %v750
          %v755 = vand.u32 2147483647, %v745
          %vm756 = vcmp.eq.f32.partialorder %v755, 8.507059e+37
          %v757 = vand.u32 %v745, 2147483648
          %v758 = vor.u32 1.1754944e-38, %v757
          %v759 = vsel %vm756, %v758, %v754
          %v760 = vmul.f32 1.0, %v759
          %s761 = scalar_lea.vmem [#allocation3], %s738
          %v762 = vld [vmem:[%s761] sm:$0xff]
          %v763 = vadd.f32 %v762, %v694
          %v764 = vxor.u32 %v763, 2147483648
          %v765 = vmul.f32 %v764, 1.442695
          %v766 = vpow.pop %v765
          %v767 = vadd.f32 %v766, 1.0
          %v768 = vrcp.pop %v767
          %v769 = vmul.f32 %v767, %v768
          %v770 = vsub.f32 1.0, %v769
          %v771 = vmul.f32 %v768, %v770
          %v772 = vadd.f32 %v768, %v771
          %vm773 = vweird.f32 %v767
          %vm774 = vweird.f32 %v768
          %vm775 = vmor %vm773, %vm774
          %v776 = vsel %vm775, %v768, %v772
          %v777 = vand.u32 2147483647, %v767
          %vm778 = vcmp.eq.f32.partialorder %v777, 8.507059e+37
          %v779 = vand.u32 %v767, 2147483648
          %v780 = vor.u32 1.1754944e-38, %v779
          %v781 = vsel %vm778, %v780, %v776
          %v782 = vmul.f32 1.0, %v781
          %s783 = scalar_lea.vmem [#allocation4], %s738
          %v784 = vld [vmem:[%s783] sm:$0xff]
          %v785 = vmul.f32 %v760, %v736
          %v786 = vadd.f32 %v784, %v785
          %v787 = vtanh.pop %v786
          %v788 = vsub.f32 1.0, %v782
          %v789 = vmul.f32 %v788, %v787
          %v790 = vmul.f32 %v782, %v613
          %v791 = vadd.f32 %v789, %v790
          %s792 = scalar_lea.vmem [#allocation14], %s738
          %793 = vst [vmem:[%s792] sm:$0xff] %v791
        $region69: #{tpu_custom_call.1} parent=39 // loop_footer
          %s612 = sadd.s32 1, %s608
        $region70: #{tpu_custom_call.1} parent=39 // loop_footer_branch
          %607 = sbr.rel target = $region66
        $region71: #{tpu_custom_call.1} parent=39 // loop_exit
          _
        // Predicated region
        $region72: #{tpu_custom_call.1} parent=39 // pred_check
          %p794 = pneg %p162
        $region73: #{tpu_custom_call.1} parent=39 // pred_check_branch
          %796 = sbr.rel (%p794) target = $region75
        $region74: #{tpu_custom_call.1} parent=39 // pred_region
          %798 = vsyncadd [#allocation7], 0
          %s799 = sshll.u32 [#allocation14], 4
          %s800 = int_to_ptr.vmem [resolvable:$true] %s799
          %s801 = sshll.u32 %s5, 4
          %s802 = int_to_ptr.hbm [resolvable:$true] %s801
          %807 = dma.vmem_to_hbm [thread:$0]  %s800, 1024, %s802, [#allocation7], 128, 128, 8
        $region75: #{tpu_custom_call.1} parent=39 // pred_fallthru
          _
        // Predicated region
        $region76: #{tpu_custom_call.1} parent=39 // pred_check
          %p808 = pneg %p162
        $region77: #{tpu_custom_call.1} parent=39 // pred_check_branch
          %810 = sbr.rel (%p808) target = $region79
        $region78: #{tpu_custom_call.1} parent=39 // pred_region
          %812 = dma.done [#allocation7], 1024
        $region79: #{tpu_custom_call.1} parent=39 // pred_fallthru
          _
      $region40: #{tpu_custom_call.1} parent=5 // pred_fallthru
        _
      %p813 = scmp.le.s32.totalorder 2, %s19
      // Predicated region
      $region80: #{tpu_custom_call.1} parent=5 // pred_check
        %p814 = pneg %p813
      $region81: #{tpu_custom_call.1} parent=5 // pred_check_branch
        %816 = sbr.rel (%p814) target = $region83
      $region82: #{tpu_custom_call.1} parent=5 // pred_region
        %s817 = ssub.s32 %s19, 2
      $region83: #{tpu_custom_call.1} parent=5 // pred_fallthru
        _
    $region6: #{tpu_custom_call.1} parent=1 // loop_footer
      %s23 = sadd.s32 1, %s19
    $region7: #{tpu_custom_call.1} parent=1 // loop_footer_branch
      %18 = sbr.rel target = $region3
    $region8: #{tpu_custom_call.1} parent=1 // loop_exit
      _
    %818 = vsyncpa [#allocation6], 1
    %s819 = scalar_lea.sflag [#allocation6], 1
    %820 = vsyncpa %s819, 1
    %821 = vsyncpa [#allocation9], 1
    %s822 = scalar_lea.sflag [#allocation9], 1
    %823 = vsyncpa %s822, 1
    %824 = vsyncpa [#allocation12], 1
    %s825 = scalar_lea.sflag [#allocation12], 1
    %826 = vsyncpa %s825, 1
    %827 = vsyncpa [#allocation7], 1
    %s828 = scalar_lea.sflag [#allocation7], 1
    %829 = vsyncpa %s828, 1

</llo_original>
